<compile_context>
chip_gen: v5e
topology: v5e:2x2
jax: 0.10.0
libtpu: 0.0.40
codegen_flags: <defaults>
</compile_context>

<pallas_src>
import numpy as np
import jax
import jax.numpy as jnp
from jax import lax
from jax.experimental import pallas as pl
from jax.experimental.pallas import tpu as pltpu


# ---------------------------------------------------------------------------
# Deterministic parameter init (matches KNetwork.__init__ / makeGaussian)
# ---------------------------------------------------------------------------
def make_gaussian(size, fwhm=3, peak=1.0, center=None):
    x = np.arange(0, size, 1, float)
    y = x[:, np.newaxis]
    if center is None:
        x0 = y0 = size // 2
    else:
        x0, y0 = center[0], center[1]
    mat = np.exp(-4 * np.log(2) * ((x - x0) ** 2 + (y - y0) ** 2) / fwhm ** 2)
    mat /= np.max(mat) / peak
    return mat


def _round_up(v, m):
    return ((v + m - 1) // m) * m


# ---------------------------------------------------------------------------
# Pallas kernel: same-size 2D cross-correlation expressed as a sum of R
# separable (rank-1) terms:  k2d = sum_r outer(col_f[r], row_f[r]).
# ---------------------------------------------------------------------------
def _build_conv_kernel(ks, H, W, Ws, p, bt, R):
    def conv_kernel(cf_ref, rf_ref, x_ref, o_ref, xp_ref, ht_ref):
        # cf_ref, rf_ref : SMEM (R*ks,) f32  -- column / row separable factors
        # x_ref          : VMEM (bt, H, W)   -- unpadded input block
        # o_ref          : VMEM (bt, H, W)   -- output block (exact shape)
        # xp_ref         : VMEM (bt, H+2p, Ws) persistent padded-input scratch
        # ht_ref         : VMEM (H+2p, W)    -- per-image horizontal-pass temp

        # Halo-only zeroing each grid step (interior is fully overwritten and
        # the grid axis is 'parallel', so no cross-step state is assumed).
        if p > 0:
            xp_ref[:, :p, :] = jnp.zeros((bt, p, Ws), jnp.float32)
            xp_ref[:, p + H:, :] = jnp.zeros((bt, p, Ws), jnp.float32)
            xp_ref[:, p:p + H, :p] = jnp.zeros((bt, H, p), jnp.float32)
            xp_ref[:, p:p + H, p + W:2 * p + W] = jnp.zeros((bt, H, p),
                                                            jnp.float32)
        # Lanes >= W + 2p are never read by any tap; leave them untouched.
        xp_ref[:, p:p + H, p:p + W] = x_ref[...]

        # Hoist the tiny SMEM weight loads out of the image loop.
        cfs = [cf_ref[i] for i in range(R * ks)]
        rfs = [rf_ref[i] for i in range(R * ks)]

        def per_image(b, carry):
            img = xp_ref.at[b]                    # (H+2p, Ws) padded image view
            acc = jnp.zeros((H, W), jnp.float32)  # register-resident accumulator
            for r in range(R):
                # Horizontal pass: the only lane-offset reads (ks per term).
                ht = jnp.zeros((H + 2 * p, W), jnp.float32)
                for dx in range(ks):
                    ht = ht + rfs[r * ks + dx] * img[:, dx:dx + W]
                ht_ref[...] = ht
                # Vertical pass: sublane-offset reads only (cheap).
                for dy in range(ks):
                    acc = acc + cfs[r * ks + dy] * ht_ref[dy:dy + H, :]
            o_ref[b] = acc.astype(o_ref.dtype)
            return carry

        lax.fori_loop(0, bt, per_image, 0, unroll=bt <= 8)

    return conv_kernel


def _vmem_budget_bytes():
    cap = 64 * 2 ** 20                           # conservative default (v7x/TC)
    try:
        cap = int(getattr(pltpu.get_tpu_info(), "vmem_capacity_bytes", cap))
    except Exception:
        pass
    # 3/4 of physical, capped at 96 MiB  ->  ~48 MiB on v7x, ~96 MiB on v5e/v6e.
    return int(min(cap * 3 // 4, 96 * 2 ** 20))


def _pick_batch_tile(N, fits):
    """Largest divisor of N that fits the VMEM budget while keeping
    >= min(N, 4) grid steps and (for v7x's 2 TensorCores) an even split."""
    divisors = [d for d in range(N, 0, -1) if N % d == 0]
    fitting = [d for d in divisors if fits(d)]
    if not fitting:
        # TODO(synk): frames so large that even bt=1 exceeds the VMEM budget
        # would need row tiling with an explicit halo (manual DMA).
        return 1
    min_steps = min(N, 4)
    for d in fitting:                            # largest bt first
        steps = N // d
        if steps >= min_steps and (steps % 2 == 0 or N % 2 == 1):
            return d
    return fitting[0]


def conv2d_separable_pallas(x_nhw, col_f, row_f):
    """Same-size 2D cross-correlation of x_nhw (N, H, W) f32 with
    k2d = sum_r outer(col_f[r], row_f[r]) and zero padding (ks-1)//2,
    i.e. F.conv2d(x[:, None], k2d[None, None], padding=(ks-1)//2)[:, 0]."""
    N, H, W = x_nhw.shape
    R, ks = col_f.shape
    assert ks % 2 == 1, "same-size conv requires odd kernel size"
    p = (ks - 1) // 2
    Ws = _round_up(W + 2 * p, 128)               # scratch lane width (x128)

    def ws_bytes(bt):                            # lane/sublane-padded footprint
        Hs, Wl = _round_up(H, 8), _round_up(W, 128)
        io = 2 * 2 * bt * Hs * Wl * 4            # double-buffered in + out
        scr = bt * _round_up(H + 2 * p, 8) * Ws * 4
        tmp = 3 * _round_up(H + 2 * p, 8) * Wl * 4   # ht scratch + live values
        return io + scr + tmp

    budget = _vmem_budget_bytes()
    bt = _pick_batch_tile(N, lambda d: ws_bytes(d) <= budget)
    vmem_limit = int(min(budget, max(32 * 2 ** 20, 2 * ws_bytes(bt))))

    cf = col_f.reshape(-1).astype(jnp.float32)
    rf = row_f.reshape(-1).astype(jnp.float32)

    grid_spec = pltpu.PrefetchScalarGridSpec(
        num_scalar_prefetch=2,                   # cf, rf -> SMEM
        grid=(N // bt,),
        in_specs=[pl.BlockSpec((bt, H, W), lambda i, cf_r, rf_r: (i, 0, 0))],
        out_specs=pl.BlockSpec((bt, H, W), lambda i, cf_r, rf_r: (i, 0, 0)),
        scratch_shapes=[pltpu.VMEM((bt, H + 2 * p, Ws), jnp.float32),
                        pltpu.VMEM((H + 2 * p, W), jnp.float32)],
    )
    return pl.pallas_call(
        _build_conv_kernel(ks, H, W, Ws, p, bt, R),
        out_shape=jax.ShapeDtypeStruct((N, H, W), x_nhw.dtype),
        grid_spec=grid_spec,
        compiler_params=pltpu.CompilerParams(
            dimension_semantics=("parallel",),
            vmem_limit_bytes=vmem_limit),
    )(cf, rf, x_nhw)


# ---------------------------------------------------------------------------
# KNetwork equivalent
# ---------------------------------------------------------------------------
def _cross_corr_same(inp2d, w2d):
    """Trace-time helper for generatekernel(): same-size cross-correlation of
    an (ls, ls) map with an (ls, ls) weight, zero padding (ls-1)//2."""
    H, W = inp2d.shape
    ks = w2d.shape[0]
    p = (ks - 1) // 2
    ip = jnp.pad(inp2d, ((p, p), (p, p)))
    out = jnp.zeros_like(inp2d)
    for dy in range(ks):
        for dx in range(ks):
            out = out + w2d[dy, dx] * ip[dy:dy + H, dx:dx + W]
    return out


class KNetworkPallas:
    def __init__(self, num_layers=3, layer_size=3, softplus=False, hardk=False,
                 beta=1.0):
        gauss = make_gaussian(layer_size, fwhm=layer_size // 2, peak=0.03)
        gauss = gauss[np.newaxis, np.newaxis, np.newaxis, :]        # (1,1,1,ls,ls)
        gauss_cat = np.concatenate(num_layers * [gauss], axis=0)    # (L,1,1,ls,ls)
        self.layers = jnp.asarray(gauss_cat, jnp.float32)
        self.num_layers = num_layers
        self.padding = (layer_size - 1) // 2
        self.softplus = softplus
        self.hardk = hardk
        self.beta = beta
        # TODO(synk): padding_mode='reflect' is stored by the PyTorch module
        # but unused by its forward (F.conv2d always zero-pads), so it is
        # intentionally omitted.

    def generatekernel(self):
        ker = self.layers[0, 0, 0]                   # (ls, ls)
        for i in range(1, self.num_layers):
            ker = _cross_corr_same(ker, self.layers[i, 0, 0])
        if self.softplus:
            # torch.nn.Softplus(beta)(x) == softplus(beta*x)/beta
            ker = jax.nn.softplus(self.beta * ker) / self.beta
        if self.hardk:
            ker = ker / jnp.sum(ker)
        return ker[None, None]                       # (1, 1, ls, ls)

    def _factors(self, k2d):
        """Separable decomposition k2d = sum_r outer(col[r], row[r])."""
        ks = k2d.shape[0]
        if not self.softplus:
            # A chain of isotropic Gaussians (optionally sum-normalized) is
            # exactly rank-1; factor it from its largest-|.| pivot.
            flat_idx = jnp.argmax(jnp.abs(k2d))
            r0, c0 = flat_idx // ks, flat_idx % ks
            pivot = k2d[r0, c0]
            col = k2d[:, c0] / pivot
            row = k2d[r0, :]
            return col[None, :], row[None, :]        # R = 1
        # Softplus breaks separability: exact fallback k = sum_r e_r (x) k[r,:]
        return jnp.eye(ks, dtype=k2d.dtype), k2d     # R = ks

    def __call__(self, x):
        # x: (N, 1, H, W) NCHW
        k2d = self.generatekernel()[0, 0]            # (ls, ls)
        col_f, row_f = self._factors(k2d)
        out_nhw = conv2d_separable_pallas(x[:, 0].astype(jnp.float32),
                                          col_f, row_f)
        return out_nhw[:, None]                      # (N, 1, H, W)


if __name__ == "__main__":
    key = jax.random.PRNGKey(0)
    N, C, H, W = 2, 1, 16, 16
    x = jax.random.normal(key, (N, C, H, W), dtype=jnp.float32)

    net = KNetworkPallas(num_layers=3, layer_size=3)
    out = jax.block_until_ready(net(x))
    assert out.shape == (N, 1, H, W)

    # Sanity check against XLA's conv (same semantics as F.conv2d).
    k = net.generatekernel()
    pp = net.padding
    ref = lax.conv_general_dilated(
        x, k, window_strides=(1, 1), padding=[(pp, pp), (pp, pp)],
        dimension_numbers=("NCHW", "OIHW", "NCHW"),
        precision=lax.Precision.HIGHEST)
    np.testing.assert_allclose(np.asarray(out), np.asarray(ref),
                               rtol=1e-5, atol=1e-8)
    print("KERNEL_OK")
</pallas_src>

<mosaic_0001>
module attributes {stable_mosaic.version = 11 : i64} {
  func.func @conv_kernel(%arg0: i32, %arg1: memref<3xf32, #tpu.memory_space<smem>>, %arg2: memref<3xf32, #tpu.memory_space<smem>>, %arg3: memref<1x16x16xf32, #tpu.memory_space<vmem>>, %arg4: memref<1x16x16xf32, #tpu.memory_space<vmem>>, %arg5: memref<1x18x128xf32, #tpu.memory_space<vmem>>, %arg6: memref<18x16xf32, #tpu.memory_space<vmem>>) attributes {dimension_semantics = [#tpu.dimension_semantics<parallel>], iteration_bounds = array<i64: 2>, scalar_prefetch = 2 : i64, scratch_operands = 2 : i64, tpu.core_type = #tpu.core_type<tc>, window_params = [{transform_indices = @transform_0, window_bounds = array<i64: 1, 16, 16>}, {transform_indices = @transform_1, window_bounds = array<i64: 1, 16, 16>}]} {
    %cst = arith.constant 0.000000e+00 : f32
    %0 = vector.broadcast %cst : f32 to vector<1x1x128xf32>
    %c0 = arith.constant 0 : index
    %c0_0 = arith.constant 0 : index
    %c0_1 = arith.constant 0 : index
    %1 = vector.load %arg5[%c0, %c0_0, %c0_1] : memref<1x18x128xf32, #tpu.memory_space<vmem>>, vector<1x1x128xf32>
    tpu.vector_store %arg5[%c0, %c0_0, %c0_1], %0 {strides = array<i32>} : memref<1x18x128xf32, #tpu.memory_space<vmem>>, vector<1x1x128xf32>,
    %cst_2 = arith.constant 0.000000e+00 : f32
    %2 = vector.broadcast %cst_2 : f32 to vector<1x1x128xf32>
    %c0_3 = arith.constant 0 : index
    %c17 = arith.constant 17 : index
    %c0_4 = arith.constant 0 : index
    %3 = vector.load %arg5[%c0_3, %c17, %c0_4] : memref<1x18x128xf32, #tpu.memory_space<vmem>>, vector<1x1x128xf32>
    tpu.vector_store %arg5[%c0_3, %c17, %c0_4], %2 {strides = array<i32>} : memref<1x18x128xf32, #tpu.memory_space<vmem>>, vector<1x1x128xf32>,
    %cst_5 = arith.constant 0.000000e+00 : f32
    %4 = vector.broadcast %cst_5 : f32 to vector<1x16x1xf32>
    %c0_6 = arith.constant 0 : index
    %c1 = arith.constant 1 : index
    %c0_7 = arith.constant 0 : index
    %5 = vector.load %arg5[%c0_6, %c1, %c0_7] : memref<1x18x128xf32, #tpu.memory_space<vmem>>, vector<1x16x1xf32>
    tpu.vector_store %arg5[%c0_6, %c1, %c0_7], %4 {strides = array<i32>} : memref<1x18x128xf32, #tpu.memory_space<vmem>>, vector<1x16x1xf32>,
    %cst_8 = arith.constant 0.000000e+00 : f32
    %6 = vector.broadcast %cst_8 : f32 to vector<1x16x1xf32>
    %c0_9 = arith.constant 0 : index
    %c1_10 = arith.constant 1 : index
    %c17_11 = arith.constant 17 : index
    %7 = vector.load %arg5[%c0_9, %c1_10, %c17_11] : memref<1x18x128xf32, #tpu.memory_space<vmem>>, vector<1x16x1xf32>
    tpu.vector_store %arg5[%c0_9, %c1_10, %c17_11], %6 {strides = array<i32>} : memref<1x18x128xf32, #tpu.memory_space<vmem>>, vector<1x16x1xf32>,
    %c0_12 = arith.constant 0 : index
    %c0_13 = arith.constant 0 : index
    %c0_14 = arith.constant 0 : index
    %8 = vector.load %arg3[%c0_12, %c0_13, %c0_14] : memref<1x16x16xf32, #tpu.memory_space<vmem>>, vector<1x16x16xf32>
    %c0_15 = arith.constant 0 : index
    %c1_16 = arith.constant 1 : index
    %c1_17 = arith.constant 1 : index
    %9 = vector.load %arg5[%c0_15, %c1_16, %c1_17] : memref<1x18x128xf32, #tpu.memory_space<vmem>>, vector<1x16x16xf32>
    tpu.vector_store %arg5[%c0_15, %c1_16, %c1_17], %8 {strides = array<i32>} : memref<1x18x128xf32, #tpu.memory_space<vmem>>, vector<1x16x16xf32>,
    %c0_18 = arith.constant 0 : index
    %10 = memref.load %arg1[%c0_18] : memref<3xf32, #tpu.memory_space<smem>>
    %c1_19 = arith.constant 1 : index
    %11 = memref.load %arg1[%c1_19] : memref<3xf32, #tpu.memory_space<smem>>
    %c2 = arith.constant 2 : index
    %12 = memref.load %arg1[%c2] : memref<3xf32, #tpu.memory_space<smem>>
    %c0_20 = arith.constant 0 : index
    %13 = memref.load %arg2[%c0_20] : memref<3xf32, #tpu.memory_space<smem>>
    %c1_21 = arith.constant 1 : index
    %14 = memref.load %arg2[%c1_21] : memref<3xf32, #tpu.memory_space<smem>>
    %c2_22 = arith.constant 2 : index
    %15 = memref.load %arg2[%c2_22] : memref<3xf32, #tpu.memory_space<smem>>
    %c0_i32 = arith.constant 0 : i32
    %cst_23 = arith.constant 0.000000e+00 : f32
    %16 = vector.broadcast %cst_23 : f32 to vector<16x16xf32>
    %cst_24 = arith.constant 0.000000e+00 : f32
    %17 = vector.broadcast %cst_24 : f32 to vector<18x16xf32>
    %c0_i32_25 = arith.constant 0 : i32
    %c0_i32_26 = arith.constant 0 : i32
    %18 = tpu.memref_slice %arg5[%c0_i32, %c0_i32_25, %c0_i32_26] : memref<1x18x128xf32, #tpu.memory_space<vmem>> -> memref<1x18x128xf32, #tpu.memory_space<vmem>>
    %19 = tpu.memref_squeeze %18 : memref<1x18x128xf32, #tpu.memory_space<vmem>> -> memref<18x128xf32, #tpu.memory_space<vmem>>
    %c0_27 = arith.constant 0 : index
    %c0_28 = arith.constant 0 : index
    %20 = vector.load %19[%c0_27, %c0_28] : memref<18x128xf32, #tpu.memory_space<vmem>>, vector<18x16xf32>
    %21 = vector.broadcast %13 : f32 to vector<18x16xf32>
    %22 = arith.mulf %21, %20 : vector<18x16xf32>
    %23 = arith.addf %17, %22 : vector<18x16xf32>
    %c0_i32_29 = arith.constant 0 : i32
    %c0_i32_30 = arith.constant 0 : i32
    %24 = tpu.memref_slice %arg5[%c0_i32, %c0_i32_29, %c0_i32_30] : memref<1x18x128xf32, #tpu.memory_space<vmem>> -> memref<1x18x128xf32, #tpu.memory_space<vmem>>
    %25 = tpu.memref_squeeze %24 : memref<1x18x128xf32, #tpu.memory_space<vmem>> -> memref<18x128xf32, #tpu.memory_space<vmem>>
    %c0_31 = arith.constant 0 : index
    %c1_32 = arith.constant 1 : index
    %26 = vector.load %25[%c0_31, %c1_32] : memref<18x128xf32, #tpu.memory_space<vmem>>, vector<18x16xf32>
    %27 = vector.broadcast %14 : f32 to vector<18x16xf32>
    %28 = arith.mulf %27, %26 : vector<18x16xf32>
    %29 = arith.addf %23, %28 : vector<18x16xf32>
    %c0_i32_33 = arith.constant 0 : i32
    %c0_i32_34 = arith.constant 0 : i32
    %30 = tpu.memref_slice %arg5[%c0_i32, %c0_i32_33, %c0_i32_34] : memref<1x18x128xf32, #tpu.memory_space<vmem>> -> memref<1x18x128xf32, #tpu.memory_space<vmem>>
    %31 = tpu.memref_squeeze %30 : memref<1x18x128xf32, #tpu.memory_space<vmem>> -> memref<18x128xf32, #tpu.memory_space<vmem>>
    %c0_35 = arith.constant 0 : index
    %c2_36 = arith.constant 2 : index
    %32 = vector.load %31[%c0_35, %c2_36] : memref<18x128xf32, #tpu.memory_space<vmem>>, vector<18x16xf32>
    %33 = vector.broadcast %15 : f32 to vector<18x16xf32>
    %34 = arith.mulf %33, %32 : vector<18x16xf32>
    %35 = arith.addf %29, %34 : vector<18x16xf32>
    %c0_37 = arith.constant 0 : index
    %c0_38 = arith.constant 0 : index
    %36 = vector.load %arg6[%c0_37, %c0_38] : memref<18x16xf32, #tpu.memory_space<vmem>>, vector<18x16xf32>
    tpu.vector_store %arg6[%c0_37, %c0_38], %35 {strides = array<i32>} : memref<18x16xf32, #tpu.memory_space<vmem>>, vector<18x16xf32>,
    %c0_39 = arith.constant 0 : index
    %c0_40 = arith.constant 0 : index
    %37 = vector.load %arg6[%c0_39, %c0_40] : memref<18x16xf32, #tpu.memory_space<vmem>>, vector<16x16xf32>
    %38 = vector.broadcast %10 : f32 to vector<16x16xf32>
    %39 = arith.mulf %38, %37 : vector<16x16xf32>
    %40 = arith.addf %16, %39 : vector<16x16xf32>
    %c1_41 = arith.constant 1 : index
    %c0_42 = arith.constant 0 : index
    %41 = vector.load %arg6[%c1_41, %c0_42] : memref<18x16xf32, #tpu.memory_space<vmem>>, vector<16x16xf32>
    %42 = vector.broadcast %11 : f32 to vector<16x16xf32>
    %43 = arith.mulf %42, %41 : vector<16x16xf32>
    %44 = arith.addf %40, %43 : vector<16x16xf32>
    %c2_43 = arith.constant 2 : index
    %c0_44 = arith.constant 0 : index
    %45 = vector.load %arg6[%c2_43, %c0_44] : memref<18x16xf32, #tpu.memory_space<vmem>>, vector<16x16xf32>
    %46 = vector.broadcast %12 : f32 to vector<16x16xf32>
    %47 = arith.mulf %46, %45 : vector<16x16xf32>
    %48 = arith.addf %44, %47 : vector<16x16xf32>
    %49 = arith.index_cast %c0_i32 : i32 to index
    %c0_45 = arith.constant 0 : index
    %c0_46 = arith.constant 0 : index
    %50 = vector.load %arg4[%49, %c0_45, %c0_46] : memref<1x16x16xf32, #tpu.memory_space<vmem>>, vector<1x16x16xf32>
    %51 = vector.shape_cast %50 : vector<1x16x16xf32> to vector<16x16xf32>
    %52 = vector.shape_cast %48 : vector<16x16xf32> to vector<1x16x16xf32>
    tpu.vector_store %arg4[%49, %c0_45, %c0_46], %52 {strides = array<i32>} : memref<1x16x16xf32, #tpu.memory_space<vmem>>, vector<1x16x16xf32>,
    %c1_i32 = arith.constant 1 : i32
    return
  }
  func.func @transform_0(%arg0: i32, %arg1: memref<3xf32, #tpu.memory_space<smem>>, %arg2: memref<3xf32, #tpu.memory_space<smem>>) -> (i32, i32, i32) {
    %c0_i32 = arith.constant 0 : i32
    %c0_i32_0 = arith.constant 0 : i32
    %c0_i32_1 = arith.constant 0 : i32
    return %arg0, %c0_i32, %c0_i32_0 : i32, i32, i32
  }
  func.func @transform_1(%arg0: i32, %arg1: memref<3xf32, #tpu.memory_space<smem>>, %arg2: memref<3xf32, #tpu.memory_space<smem>>) -> (i32, i32, i32) {
    %c0_i32 = arith.constant 0 : i32
    %c0_i32_0 = arith.constant 0 : i32
    %c0_i32_1 = arith.constant 0 : i32
    return %arg0, %c0_i32, %c0_i32_0 : i32, i32, i32
  }
}

</mosaic_0001>

<llo_original>
// kernel: tpu_custom_call.1
$region0: #{tpu_custom_call.1}
  #allocation0 [shape = 'u32[]', space=smem, size = 0x4, offset = 0x4, fixed_abs, tag = 'smem constant byte address 0x4 - core index']
  #allocation1 [shape = 'u32[72,128]{1,0:T(1,128)}', space=vmem, size = 0x9000, scoped, tag = 'internal scratch']
  #allocation2 [shape = 'f32[1,18,128]{2,1,0:T(8,128)}', space=vmem, size = 0x3000, scoped, tag = 'scratch operand']
  #allocation3 [shape = 'f32[18,16]{1,0:T(8,128)}', space=vmem, size = 0x3000, scoped, tag = 'scratch operand']
  #allocation4 [shape = 's32[1]{0}', space=sflag, size = 0x4, scoped, tag = 'scoped memory for tpu_custom_call.1']
  #allocation5 [shape = 'u8[512]{0}', space=smem, size = 0x200, scoped, tag = 'prefetched SMEM operand 0']
  #allocation6 [shape = 'u8[512]{0}', space=smem, size = 0x200, scoped, tag = 'prefetched SMEM operand 1']
  %s0 = inlined_call_operand.hbm [shape: f32[3], index: 0, kind: input, shape index: {}]
  %s1 = inlined_call_operand.hbm [shape: f32[3], index: 1, kind: input, shape index: {}]
  %s2 = inlined_call_operand.hbm [shape: f32[2,16,16], index: 2, kind: input, shape index: {}]
  %s3 = inlined_call_operand.hbm [shape: f32[2,16,16], index: 3, kind: output, shape index: {}]
  %s4 = sld [smem:[#allocation0]]
  $region41: #{tpu_custom_call.1} parent=0
    _
  %s6 = ssub.s32 1, %s4
  %s7 = scalar_select 0, %s6, %s4
  %s9 = sshll.u32 %s0, 4
  %s10 = int_to_ptr.hbm [resolvable:$true] %s9
  %12 = dma.hbm_to_smem %s10, 16, [#allocation5], [#allocation4]
  %s14 = sshll.u32 %s1, 4
  %s15 = int_to_ptr.hbm [resolvable:$true] %s14
  %17 = dma.hbm_to_smem %s15, 16, [#allocation6], [#allocation4]
  %19 = dma.done [#allocation4], 32
  %20 = sfence
  $region1: #{tpu_custom_call.1} parent=0
    #allocation7 [shape = 'u8[16384]{0}', space=vmem, size = 0x4000, scoped, tag = 'input window, operand 2']
    #allocation8 [shape = 's32[2]{0}', space=sflag, size = 0x8, scoped, tag = 'scoped memory for tpu_custom_call.1']
    #allocation9 [shape = 's32[2]{0}', space=sflag, size = 0x8, scoped, tag = 'scoped memory for tpu_custom_call.1']
    #allocation10 [shape = 'u8[16384]{0}', space=vmem, size = 0x4000, scoped, tag = 'output window, operand 0']
    %21 = vsyncpa [#allocation8], 0
    %s22 = scalar_lea.sflag [#allocation8], 1
    %23 = vsyncpa %s22, 0
    %24 = vsyncpa [#allocation9], 0
    %s25 = scalar_lea.sflag [#allocation9], 1
    %26 = vsyncpa %s25, 0
    loop: start=0, step=1, limit=4
    $region2: #{tpu_custom_call.1} parent=1 // loop_pre_header
      _
    $region3: #{tpu_custom_call.1} parent=1 // loop_header
      %s28 = sphi 0, %s32
      %p29 = scmp.ge.s32.totalorder %s28, 4
      %s38 = sphi 0, %s40
      %s41 = sphi 0, %s38
      %s42 = sphi 0, %s41
      %s58 = sphi 0, %s42
      %s64 = sphi 0, %s66
      %s67 = sphi 0, %s64
      %s68 = sphi 0, %s67
      %s84 = sphi 0, %s68
    $region4: #{tpu_custom_call.1} parent=1 // loop_header_branch
      %31 = sbr.rel (%p29) target = $region8
    $region5: #{tpu_custom_call.1} parent=1 // loop_body
      %s33 = ssub.s32 %s28, 1
      %s34 = ssub.s32 %s28, 2
      %s35 = sadd.s32 %s28, 1
      %s36 = ssub.s32 %s28, %s35
      %p37 = scmp.eq.s32.totalorder %s36, 0
      %s39 = sadd.s32 %s38, 1
      %s40 = scalar_select %p37, %s38, %s39
      %p43 = pneg %p37
      %p44 = scmp.eq.s32.totalorder %s28, 1
      %p45 = por %p43, %p44
      %p46 = scmp.ne.s32.totalorder %s38, %s41
      %p47 = scmp.eq.s32.totalorder %s28, 0
      %p48 = por %p46, %p47
      %p49 = scmp.ne.s32.totalorder %s38, %s41
      %p50 = scmp.eq.s32.totalorder %s33, 1
      %p51 = por %p49, %p50
      %p52 = scmp.ne.s32.totalorder %s41, %s42
      %p53 = scmp.eq.s32.totalorder %s33, 0
      %p54 = por %p52, %p53
      %p55 = scmp.ne.s32.totalorder %s41, %s42
      %p56 = scmp.eq.s32.totalorder %s34, 1
      %p57 = por %p55, %p56
      %p59 = scmp.ne.s32.totalorder %s42, %s58
      %p60 = scmp.eq.s32.totalorder %s34, 0
      %p61 = por %p59, %p60
      %s62 = ssub.s32 %s28, %s35
      %p63 = scmp.eq.s32.totalorder %s62, 0
      %s65 = sadd.s32 %s64, 1
      %s66 = scalar_select %p63, %s64, %s65
      %p69 = pneg %p63
      %p70 = scmp.eq.s32.totalorder %s28, 1
      %p71 = por %p69, %p70
      %p72 = scmp.ne.s32.totalorder %s64, %s67
      %p73 = scmp.eq.s32.totalorder %s28, 0
      %p74 = por %p72, %p73
      %p75 = scmp.ne.s32.totalorder %s64, %s67
      %p76 = scmp.eq.s32.totalorder %s33, 1
      %p77 = por %p75, %p76
      %p78 = scmp.ne.s32.totalorder %s67, %s68
      %p79 = scmp.eq.s32.totalorder %s33, 0
      %p80 = por %p78, %p79
      %p81 = scmp.ne.s32.totalorder %s67, %s68
      %p82 = scmp.eq.s32.totalorder %s34, 1
      %p83 = por %p81, %p82
      %p85 = scmp.ne.s32.totalorder %s68, %s84
      %p86 = scmp.eq.s32.totalorder %s34, 0
      %p87 = por %p85, %p86
      %p88 = scmp.le.s32.totalorder 1, %s28
      %p89 = scmp.lt.s32.totalorder %s28, 3
      %p90 = pnand %p88, %p89
      %p91 = pneg %p90
      // Predicated region
      $region9: #{tpu_custom_call.1} parent=5 // pred_check
        _
      $region10: #{tpu_custom_call.1} parent=5 // pred_check_branch
        %93 = sbr.rel (%p90) target = $region12
      $region11: #{tpu_custom_call.1} parent=5 // pred_region
        %s94 = ssub.s32 %s28, 1
      $region12: #{tpu_custom_call.1} parent=5 // pred_fallthru
        _
      %p95 = scmp.lt.s32.totalorder %s28, 2
      // Predicated region
      $region13: #{tpu_custom_call.1} parent=5 // pred_check
        %p96 = pneg %p95
      $region14: #{tpu_custom_call.1} parent=5 // pred_check_branch
        %98 = sbr.rel (%p96) target = $region16
      $region15: #{tpu_custom_call.1} parent=5 // pred_region
        // Predicated region
        $region17: #{tpu_custom_call.1} parent=15 // pred_check
          %p99 = pneg %p48
        $region18: #{tpu_custom_call.1} parent=15 // pred_check_branch
          %101 = sbr.rel (%p99) target = $region20
        $region19: #{tpu_custom_call.1} parent=15 // pred_region
          %s102 = sand.u32 %s38, 1
          %s103 = scalar_lea.sflag [#allocation8], %s102
          %s104 = sand.u32 %s38, 1
          %s105 = smul.addr %s104, 16
          %s106 = scalar_lea.vmem [#allocation7], %s105
          %108 = vsyncadd %s103, 0
          %s109 = smul.addr %s28, 2
          %s110 = smul.addr %s109, 8
          %s111 = scalar_lea.hbm %s2, %s110
          %s112 = sshll.u32 %s111, 4
          %s113 = int_to_ptr.hbm [resolvable:$true] %s112
          %s114 = sshll.u32 %s106, 4
          %s115 = int_to_ptr.vmem [resolvable:$true] %s114
          %120 = dma.hbm_to_vmem [thread:$0]  %s113, 256, %s115, %s103, 128, 128, 8
        $region20: #{tpu_custom_call.1} parent=15 // pred_fallthru
          _
      $region16: #{tpu_custom_call.1} parent=5 // pred_fallthru
        _
      %p121 = scmp.le.s32.totalorder 1, %s28
      %p122 = scmp.lt.s32.totalorder %s28, 3
      %p123 = pnand %p121, %p122
      %p124 = pneg %p123
      // Predicated region
      $region21: #{tpu_custom_call.1} parent=5 // pred_check
        _
      $region22: #{tpu_custom_call.1} parent=5 // pred_check_branch
        %126 = sbr.rel (%p123) target = $region24
      $region23: #{tpu_custom_call.1} parent=5 // pred_region
        %s127 = ssub.s32 %s28, 1
        %s128 = sand.u32 %s41, 1
        %s129 = scalar_lea.sflag [#allocation8], %s128
        %s130 = sand.u32 %s41, 1
        %s131 = smul.addr %s130, 16
        %s132 = scalar_lea.vmem [#allocation7], %s131
        // Predicated region
        $region25: #{tpu_custom_call.1} parent=23 // pred_check
          %p133 = pneg %p54
        $region26: #{tpu_custom_call.1} parent=23 // pred_check_branch
          %135 = sbr.rel (%p133) target = $region28
        $region27: #{tpu_custom_call.1} parent=23 // pred_region
          %137 = dma.done %s129, 256
        $region28: #{tpu_custom_call.1} parent=23 // pred_fallthru
          _
        %s138 = sand.u32 %s41, 1
        %s139 = scalar_lea.sflag [#allocation8], %s138
        %s140 = sand.u32 %s41, 1
        %s141 = smul.addr %s140, 16
        %s142 = scalar_lea.vmem [#allocation7], %s141
        %p143 = pneg %p54
        %p144 = pneg %p51
        %p145 = pneg %p80
        %p146 = pneg %p77
        %s147 = sand.u32 %s67, 1
        %s148 = scalar_lea.sflag [#allocation9], %s147
        %s149 = sand.u32 %s67, 1
        %s150 = smul.addr %s149, 16
        %s151 = scalar_lea.vmem [#allocation10], %s150
        %152 = vst [vmem:[#allocation2] sm:$0x1] 0.0
        %153 = vst [vmem:[#allocation2 + $0x11] sm:$0x1] 0.0
        %vm154 = vcmask 7168
        %155 = vst.msk [vmem:[#allocation2 + $0x1] sm:$0xff] %vm154, 0.0
        %156 = vst.msk [vmem:[#allocation2 + $0x9] sm:$0xff] %vm154, 0.0
        %vm157 = vcmask 146568
        %158 = vst.msk [vmem:[#allocation2 + $0x1] sm:$0xff] %vm157, 0.0
        %159 = vst.msk [vmem:[#allocation2 + $0x9] sm:$0xff] %vm157, 0.0
        %v160 = vld [vmem:[%s132] sm:$0xff]
        %v161 = vld [vmem:[%s132 + $0x8] sm:$0xff]
        %164 = vrot.lane.b32.xlu0 %v160, 1
        %v165 = vpop.permute.xlu0 %164
        %166 = vrot.lane.b32.xlu0 %v161, 1
        %v167 = vpop.permute.xlu0 %166
        %vm170 = vcmask 138248
        %171 = vst.msk [vmem:[#allocation2 + $0x1] sm:$0xff] %vm170, %v165
        %172 = vst.msk [vmem:[#allocation2 + $0x9] sm:$0xff] %vm170, %v167
        %s173 = sld [smem:[#allocation5]]
        %s174 = sld [smem:[#allocation5 + $0x1]]
        %s175 = sld [smem:[#allocation5 + $0x2]]
        %s176 = sld [smem:[#allocation6]]
        %s177 = sld [smem:[#allocation6 + $0x1]]
        %s178 = sld [smem:[#allocation6 + $0x2]]
        %v179 = vld [vmem:[#allocation2] sm:$0xff]
        %v180 = vld [vmem:[#allocation2 + $0x8] sm:$0xff]
        %v181 = vld [vmem:[#allocation2 + $0x10] sm:$0x3]
        %v182 = vstv %s176
        %v183 = vmul.f32 %v182, %v179
        %v184 = vmul.f32 %v182, %v180
        %v185 = vmul.f32 %v182, %v181
        %v186 = vadd.f32 %v183, 0.0
        %v187 = vadd.f32 %v184, 0.0
        %v188 = vadd.f32 %v185, 0.0
        %v189 = vstv %s177
        %v190 = vmul.f32 %v189, %v179
        %v191 = vmul.f32 %v189, %v180
        %v192 = vmul.f32 %v189, %v181
        %196 = vrot.lane.b32.xlu0 %v190, 127
        %v197 = vpop.permute.xlu0 %196
        %198 = vrot.lane.b32.xlu0 %v191, 127
        %v199 = vpop.permute.xlu0 %198
        %200 = vrot.lane.b32.xlu0 %v192, 127
        %v201 = vpop.permute.xlu0 %200
        %v205 = vadd.f32 %v186, %v197
        %v206 = vadd.f32 %v187, %v199
        %v207 = vadd.f32 %v188, %v201
        %v208 = vstv %s178
        %v209 = vmul.f32 %v208, %v179
        %v210 = vmul.f32 %v208, %v180
        %v211 = vmul.f32 %v208, %v181
        %215 = vrot.lane.b32.xlu0 %v209, 126
        %v216 = vpop.permute.xlu0 %215
        %217 = vrot.lane.b32.xlu0 %v210, 126
        %v218 = vpop.permute.xlu0 %217
        %219 = vrot.lane.b32.xlu0 %v211, 126
        %v220 = vpop.permute.xlu0 %219
        %v224 = vadd.f32 %v205, %v216
        %v225 = vadd.f32 %v206, %v218
        %v226 = vadd.f32 %v207, %v220
        %vm227 = vcmask 130048
        %228 = vst.msk [vmem:[#allocation3] sm:$0xff] %vm227, %v224
        %229 = vst.msk [vmem:[#allocation3 + $0x8] sm:$0xff] %vm227, %v225
        %vm230 = vcmask 123904
        %231 = vst.msk [vmem:[#allocation3 + $0x10] sm:$0x3] %vm230, %v226
        %v232 = vld [vmem:[#allocation3] sm:$0xff]
        %v233 = vld [vmem:[#allocation3 + $0x8] sm:$0xff]
        %v234 = vstv %s173
        %v235 = vmul.f32 %v234, %v232
        %v236 = vmul.f32 %v234, %v233
        %v237 = vadd.f32 %v235, 0.0
        %v238 = vadd.f32 %v236, 0.0
        %v239 = vld [vmem:[#allocation3 + $0x1] sm:$0xff]
        %v240 = vld [vmem:[#allocation3 + $0x9] sm:$0xff]
        %v241 = vstv %s174
        %v242 = vmul.f32 %v241, %v239
        %v243 = vmul.f32 %v241, %v240
        %v244 = vadd.f32 %v237, %v242
        %v245 = vadd.f32 %v238, %v243
        %v246 = vld [vmem:[#allocation3 + $0x2] sm:$0xff]
        %v247 = vld [vmem:[#allocation3 + $0xa] sm:$0xff]
        %v248 = vstv %s175
        %v249 = vmul.f32 %v248, %v246
        %v250 = vmul.f32 %v248, %v247
        %v251 = vadd.f32 %v244, %v249
        %v252 = vadd.f32 %v245, %v250
        %253 = vst.msk [vmem:[%s151] sm:$0xff] %vm227, %v251
        %254 = vst.msk [vmem:[%s151 + $0x8] sm:$0xff] %vm227, %v252
        %s255 = sand.u32 %s67, 1
        %s256 = scalar_lea.sflag [#allocation9], %s255
        %s257 = sand.u32 %s67, 1
        %s258 = smul.addr %s257, 16
        %s259 = scalar_lea.vmem [#allocation10], %s258
        // Predicated region
        $region29: #{tpu_custom_call.1} parent=23 // pred_check
          %p260 = pneg %p77
        $region30: #{tpu_custom_call.1} parent=23 // pred_check_branch
          %262 = sbr.rel (%p260) target = $region32
        $region31: #{tpu_custom_call.1} parent=23 // pred_region
          %264 = vsyncadd %s256, 0
          %s265 = smul.addr %s33, 2
          %s266 = smul.addr %s265, 8
          %s267 = scalar_lea.hbm %s3, %s266
          %s268 = sshll.u32 %s259, 4
          %s269 = int_to_ptr.vmem [resolvable:$true] %s268
          %s270 = sshll.u32 %s267, 4
          %s271 = int_to_ptr.hbm [resolvable:$true] %s270
          %276 = dma.vmem_to_hbm [thread:$0]  %s269, 256, %s271, %s256, 128, 128, 8
        $region32: #{tpu_custom_call.1} parent=23 // pred_fallthru
          _
      $region24: #{tpu_custom_call.1} parent=5 // pred_fallthru
        _
      %p277 = scmp.le.s32.totalorder 2, %s28
      // Predicated region
      $region33: #{tpu_custom_call.1} parent=5 // pred_check
        %p278 = pneg %p277
      $region34: #{tpu_custom_call.1} parent=5 // pred_check_branch
        %280 = sbr.rel (%p278) target = $region36
      $region35: #{tpu_custom_call.1} parent=5 // pred_region
        %s281 = ssub.s32 %s28, 2
        // Predicated region
        $region37: #{tpu_custom_call.1} parent=35 // pred_check
          %p282 = pneg %p83
        $region38: #{tpu_custom_call.1} parent=35 // pred_check_branch
          %284 = sbr.rel (%p282) target = $region40
        $region39: #{tpu_custom_call.1} parent=35 // pred_region
          %s285 = sand.u32 %s68, 1
          %s286 = scalar_lea.sflag [#allocation9], %s285
          %s287 = sand.u32 %s68, 1
          %s288 = smul.addr %s287, 16
          %s289 = scalar_lea.vmem [#allocation10], %s288
          %291 = dma.done %s286, 256
        $region40: #{tpu_custom_call.1} parent=35 // pred_fallthru
          _
      $region36: #{tpu_custom_call.1} parent=5 // pred_fallthru
        _
    $region6: #{tpu_custom_call.1} parent=1 // loop_footer
      %s32 = sadd.s32 1, %s28
    $region7: #{tpu_custom_call.1} parent=1 // loop_footer_branch
      %27 = sbr.rel target = $region3
    $region8: #{tpu_custom_call.1} parent=1 // loop_exit
      _
    %292 = vsyncpa [#allocation8], 1
    %s293 = scalar_lea.sflag [#allocation8], 1
    %294 = vsyncpa %s293, 1
    %295 = vsyncpa [#allocation9], 1
    %s296 = scalar_lea.sflag [#allocation9], 1
    %297 = vsyncpa %s296, 1

</llo_original>
